<compile_context>
chip_gen: v5e
topology: v5e:2x2
jax: 0.10.0
libtpu: 0.0.40
codegen_flags: <defaults>
</compile_context>

<pallas_src>
import jax
import jax.numpy as jnp
from jax.experimental import pallas as pl
from jax.experimental.pallas import tpu as pltpu


def _round_up(x, m):
    return (x + m - 1) // m * m


def _pick_tile(n, granularity, cap=512):
    """Pick a tile size (multiple of `granularity`, <= cap) minimizing padding."""
    full = _round_up(max(n, 1), granularity)
    cands = {c for c in (full, 128, 256, 512) if granularity <= c <= cap}
    if not cands:
        cands = {granularity}
    # Minimize padded waste, tie-break toward the larger tile.
    return min(cands, key=lambda t: (_round_up(n, t) - n, -t))


def _vmem_limit(footprint_bytes):
    # footprint already includes double-buffered blocks; 1.5x headroom,
    # 16 MiB floor, 48 MiB cap (valid on v5e/v6e/v7x).
    return int(min(max(int(footprint_bytes * 1.5), 16 << 20), 48 << 20))


# ---------------------------------------------------------------------------
# Kernels
# ---------------------------------------------------------------------------

def _matmul_kernel(x_ref, w_ref, o_ref):
    """o = x @ w for one (batch, out) tile; w is pre-transposed to [K, N]."""
    o_ref[...] = jax.lax.dot_general(
        x_ref[...], w_ref[...],
        dimension_numbers=(((1,), (0,)), ((), ())),
        preferred_element_type=jnp.float32,
    ).astype(o_ref.dtype)


def _ksum_matmul_kernel(x_ref, w_ref, o_ref):
    """K-streamed matmul accumulating directly into the resident f32 output block."""
    k = pl.program_id(2)

    @pl.when(k == 0)
    def _():
        o_ref[...] = jnp.zeros_like(o_ref)

    o_ref[...] += jax.lax.dot_general(
        x_ref[...], w_ref[...],
        dimension_numbers=(((1,), (0,)), ((), ())),
        preferred_element_type=jnp.float32,
    )


# ---------------------------------------------------------------------------
# Module wrapper
# ---------------------------------------------------------------------------

_SMALL_PATH_BYTES = 2 << 20       # whole problem comfortably in one VMEM tile
_RESIDENT_PATH_BYTES = 24 << 20   # full-K weight panel + x block, double-buffered


class PallasClassifier:
    """Pallas port of the PyTorch `Classifier` module (forward = x @ w.T)."""

    def __init__(self, mean, std, epsilon, *, use_bf16_operands=True,
                 tile_n=None, tile_k=None, force_path=None):
        d_out, d_in = mean.shape
        assert std.shape == (d_out, d_in) and epsilon.shape == (d_out, d_in)
        self.d_in, self.d_out = d_in, d_out
        self.use_bf16 = use_bf16_operands
        self.force_path = force_path

        # --- hoisted: reparameterize + transpose + cast, once at init -------
        w = mean + std * epsilon                      # [D_out, D_in]  (module's self.w)
        w_t = w.T                                     # [D_in, D_out]  MXU-ready layout
        if use_bf16_operands:
            w_t = w_t.astype(jnp.bfloat16)
        self.w_t = w_t                                # unpadded (single-tile path)

        # --- hoisted: lane-granular padding + weight-side tile choice -------
        self.kp = _round_up(d_in, 128)
        self.np_ = _round_up(d_out, 128)
        tn = tile_n if tile_n is not None else _pick_tile(d_out, 128)
        tk = tile_k if tile_k is not None else _pick_tile(d_in, 128)
        if self.np_ % tn:
            tn = 128
        if self.kp % tk:
            tk = 128
        self.tn, self.tk = tn, tk
        if (self.kp, self.np_) != (d_in, d_out):
            self.w_pad = jnp.pad(w_t, ((0, self.kp - d_in), (0, self.np_ - d_out)))
        else:
            self.w_pad = w_t

    # -- dispatch ---------------------------------------------------------
    def __call__(self, x):
        assert x.ndim == 2 and x.shape[1] == self.d_in
        if self.use_bf16:
            x = x.astype(jnp.bfloat16)
        path = self.force_path or self._pick_path(x)
        if path == "single":
            return self._forward_single(x)
        if path == "resident":
            return self._forward_resident(x)
        return self._forward_ksum(x)

    def _pick_path(self, x):
        b = x.shape[0]
        itemsize = jnp.dtype(x.dtype).itemsize
        small = (b * self.d_in + self.d_in * self.d_out) * itemsize + b * self.d_out * 4
        if small <= _SMALL_PATH_BYTES:
            return "single"
        tm = _pick_tile(b, 8)
        resident = ((2 * tm * self.kp + 2 * self.kp * self.tn) * itemsize
                    + 2 * tm * self.tn * 4)
        return "resident" if resident <= _RESIDENT_PATH_BYTES else "ksum"

    # -- path A: one tile, no grid, no padding ------------------------------
    def _forward_single(self, x):
        b = x.shape[0]
        return pl.pallas_call(
            _matmul_kernel,
            out_shape=jax.ShapeDtypeStruct((b, self.d_out), jnp.float32),
            in_specs=[pl.BlockSpec(memory_space=pltpu.MemorySpace.VMEM),
                      pl.BlockSpec(memory_space=pltpu.MemorySpace.VMEM)],
            out_specs=pl.BlockSpec(memory_space=pltpu.MemorySpace.VMEM),
        )(x, self.w_t)

    # -- path B: 2-D grid, full-K weight panel resident per output tile -----
    def _forward_resident(self, x):
        b, k = x.shape
        tm = _pick_tile(b, 8)
        bp = _round_up(b, tm)
        kp, np_, tn = self.kp, self.np_, self.tn
        if (bp, kp) != (b, k):
            x = jnp.pad(x, ((0, bp - b), (0, kp - k)))
        itemsize = jnp.dtype(x.dtype).itemsize
        vmem = _vmem_limit((2 * tm * kp + 2 * kp * tn) * itemsize + 2 * tm * tn * 4)
        out = pl.pallas_call(
            _matmul_kernel,
            out_shape=jax.ShapeDtypeStruct((bp, np_), jnp.float32),
            grid_spec=pltpu.PrefetchScalarGridSpec(
                num_scalar_prefetch=0,
                # j (output tiles) outer, i (batch tiles) inner: the weight
                # panel's block index (0, j) is unchanged across consecutive
                # inner i steps -> weight-stationary (one weight DMA per j).
                grid=(np_ // tn, bp // tm),
                in_specs=[
                    pl.BlockSpec((tm, kp), lambda j, i: (i, 0)),
                    pl.BlockSpec((kp, tn), lambda j, i: (0, j)),
                ],
                out_specs=pl.BlockSpec((tm, tn), lambda j, i: (i, j)),
            ),
            compiler_params=pltpu.CompilerParams(
                dimension_semantics=("parallel", "parallel"),
                vmem_limit_bytes=vmem,
            ),
        )(x, self.w_pad)
        return out[:b, :self.d_out]

    # -- path C: 3-D grid, K streamed, accumulate into resident f32 output --
    def _forward_ksum(self, x):
        b, k = x.shape
        tm = _pick_tile(b, 8)
        bp = _round_up(b, tm)
        kp, np_, tn, tk = self.kp, self.np_, self.tn, self.tk
        if (bp, kp) != (b, k):
            x = jnp.pad(x, ((0, bp - b), (0, kp - k)))
        itemsize = jnp.dtype(x.dtype).itemsize
        vmem = _vmem_limit((2 * tm * tk + 2 * tk * tn) * itemsize + 2 * tm * tn * 4)
        out = pl.pallas_call(
            _ksum_matmul_kernel,
            out_shape=jax.ShapeDtypeStruct((bp, np_), jnp.float32),
            grid_spec=pltpu.PrefetchScalarGridSpec(
                num_scalar_prefetch=0,
                grid=(bp // tm, np_ // tn, kp // tk),   # reduction axis innermost
                in_specs=[
                    pl.BlockSpec((tm, tk), lambda i, j, kk: (i, kk)),
                    pl.BlockSpec((tk, tn), lambda i, j, kk: (kk, j)),
                ],
                out_specs=pl.BlockSpec((tm, tn), lambda i, j, kk: (i, j)),
            ),
            compiler_params=pltpu.CompilerParams(
                dimension_semantics=("parallel", "parallel", "arbitrary"),
                vmem_limit_bytes=vmem,
            ),
        )(x, self.w_pad)
        return out[:b, :self.d_out]


if __name__ == "__main__":
    key = jax.random.PRNGKey(0)
    k_x, k_mean, k_std, k_eps, k_x2 = jax.random.split(key, 5)

    # ---- the module's real (tiny) classifier-head shapes -> "single" path ----
    B, D_in, D_out = 8, 32, 16
    x = jax.random.normal(k_x, (B, D_in), dtype=jnp.float32)
    mean = jax.random.normal(k_mean, (D_out, D_in), dtype=jnp.float32)
    std = jax.nn.softplus(jax.random.normal(k_std, (D_out, D_in), dtype=jnp.float32))
    eps = jax.random.normal(k_eps, (D_out, D_in), dtype=jnp.float32)

    ref = jnp.matmul(x, (mean + std * eps).T, precision=jax.lax.Precision.HIGHEST)

    # f32-operand path: bit-faithful to the module semantics.
    clf_f32 = PallasClassifier(mean, std, eps, use_bf16_operands=False)
    out = clf_f32(x)
    jax.block_until_ready(out)
    assert out.shape == (B, D_out)
    assert jnp.allclose(out, ref, atol=1e-5, rtol=1e-5)

    # bf16-operand path (f32 accumulation): perf default.
    clf_bf16 = PallasClassifier(mean, std, eps, use_bf16_operands=True)
    out_bf16 = clf_bf16(x)
    jax.block_until_ready(out_bf16)
    assert out_bf16.shape == (B, D_out)
    assert jnp.allclose(out_bf16, ref, atol=1e-1, rtol=5e-2)

    # ---- larger synthetic shapes to exercise the tiled paths -----------------
    B2, D_in2, D_out2 = 300, 512, 384
    x2 = jax.random.normal(k_x2, (B2, D_in2), dtype=jnp.float32)
    mean2 = jax.random.normal(k_mean, (D_out2, D_in2), dtype=jnp.float32)
    std2 = jax.nn.softplus(jax.random.normal(k_std, (D_out2, D_in2), dtype=jnp.float32))
    eps2 = jax.random.normal(k_eps, (D_out2, D_in2), dtype=jnp.float32)
    ref2 = jnp.matmul(x2, (mean2 + std2 * eps2).T,
                      precision=jax.lax.Precision.HIGHEST)

    # Weight-resident 2-D grid path (weight-stationary, batch padding 300->304).
    clf_res = PallasClassifier(mean2, std2, eps2, use_bf16_operands=False,
                               force_path="resident")
    out_res = clf_res(x2)
    jax.block_until_ready(out_res)
    assert out_res.shape == (B2, D_out2)
    assert jnp.allclose(out_res, ref2, atol=5e-2, rtol=1e-2)

    # K-streamed 3-D grid path with accumulation into the resident f32 output.
    clf_ks = PallasClassifier(mean2, std2, eps2, use_bf16_operands=False,
                              tile_k=128, force_path="ksum")
    out_ks = clf_ks(x2)
    jax.block_until_ready(out_ks)
    assert out_ks.shape == (B2, D_out2)
    assert jnp.allclose(out_ks, ref2, atol=5e-2, rtol=1e-2)

    print("KERNEL_OK")
</pallas_src>

<mosaic_0001>
module attributes {stable_mosaic.version = 11 : i64} {
  func.func @_matmul_kernel(%arg0: memref<8x32xf32, #tpu.memory_space<vmem>>, %arg1: memref<32x16xf32, #tpu.memory_space<vmem>>, %arg2: memref<8x16xf32, #tpu.memory_space<vmem>>) attributes {dimension_semantics = [], scalar_prefetch = 0 : i64, scratch_operands = 0 : i64, tpu.core_type = #tpu.core_type<tc>} {
    %c0 = arith.constant 0 : index
    %c0_0 = arith.constant 0 : index
    %0 = vector.load %arg0[%c0, %c0_0] : memref<8x32xf32, #tpu.memory_space<vmem>>, vector<8x32xf32>
    %c0_1 = arith.constant 0 : index
    %c0_2 = arith.constant 0 : index
    %1 = vector.load %arg1[%c0_1, %c0_2] : memref<32x16xf32, #tpu.memory_space<vmem>>, vector<32x16xf32>
    %cst = arith.constant dense<0.000000e+00> : vector<8x16xf32>
    %2 = tpu.matmul %0, %1, %cst {dimension_numbers = #tpu.dot_dimension_numbers<[1], [0], [0], [1], [0, 0, 1, 1], [], []>} : vector<8x32xf32>, vector<32x16xf32>, vector<8x16xf32> -> vector<8x16xf32>
    %c0_3 = arith.constant 0 : index
    %c0_4 = arith.constant 0 : index
    %3 = vector.load %arg2[%c0_3, %c0_4] : memref<8x16xf32, #tpu.memory_space<vmem>>, vector<8x16xf32>
    tpu.vector_store %arg2[%c0_3, %c0_4], %2 {strides = array<i32>} : memref<8x16xf32, #tpu.memory_space<vmem>>, vector<8x16xf32>,
    return
  }
}

</mosaic_0001>

<llo_original>
// kernel: tpu_custom_call.1
$region0: #{tpu_custom_call.1}
  #allocation0 [shape = 'u32[]', space=smem, size = 0x4, offset = 0x4, fixed_abs, tag = 'smem constant byte address 0x4 - core index']
  #allocation1 [shape = 'u32[72,128]{1,0:T(1,128)}', space=vmem, size = 0x9000, scoped, tag = 'internal scratch']
  %s0 = inlined_call_operand.vmem [shape: f32[8,32], index: 0, kind: input, shape index: {}]
  %s1 = inlined_call_operand.vmem [shape: f32[32,16], index: 1, kind: input, shape index: {}]
  %s2 = inlined_call_operand.hbm [shape: f32[8,16], index: 2, kind: output, shape index: {}]
  %s3 = sld [smem:[#allocation0]]
  $region18: #{tpu_custom_call.1} parent=0
    _
  %s5 = ssub.s32 1, %s3
  %s6 = scalar_select 0, %s5, %s3
  $region1: #{tpu_custom_call.1} parent=0
    #allocation2 [shape = 'u8[4096]{0}', space=vmem, size = 0x1000, scoped, tag = 'output window, operand 0, single buffered']
    #allocation3 [shape = 's32[1]{0}', space=sflag, size = 0x4, scoped, tag = 'scoped memory for tpu_custom_call.1']
    %7 = vsyncpa [#allocation3], 0
    // Predicated region
    $region2: #{tpu_custom_call.1} parent=1 // pred_check
      _
    $region3: #{tpu_custom_call.1} parent=1 // pred_check_branch
      %9 = sbr.rel (0) target = $region5
    $region4: #{tpu_custom_call.1} parent=1 // pred_region
      _
    $region5: #{tpu_custom_call.1} parent=1 // pred_fallthru
      _
    // Predicated region
    $region6: #{tpu_custom_call.1} parent=1 // pred_check
      _
    $region7: #{tpu_custom_call.1} parent=1 // pred_check_branch
      %11 = sbr.rel (0) target = $region9
    $region8: #{tpu_custom_call.1} parent=1 // pred_region
      _
    $region9: #{tpu_custom_call.1} parent=1 // pred_fallthru
      _
    %v12 = vld [vmem:[%s0] sm:$0xff]
    %v13 = vld [vmem:[%s1] sm:$0xff]
    %v14 = vld [vmem:[%s1 + $0x8] sm:$0xff]
    %v15 = vld [vmem:[%s1 + $0x10] sm:$0xff]
    %v16 = vld [vmem:[%s1 + $0x18] sm:$0xff]
    %vm17 = vcmask 261120
    %v19 = vsel %vm17, %v12, 0
    %21 = vmatpush.msra.mxu0 0.0
    %22 = vmatpush.msra.mxu0 0.0
    %23 = vmatpush.msra.mxu0 0.0
    %24 = vmatpush.msra.mxu0 0.0
    %25 = vmatpush.msra.mxu0 0.0
    %26 = vmatpush.msra.mxu0 0.0
    %27 = vmatpush.msra.mxu0 0.0
    %28 = vmatpush.msra.mxu0 0.0
    %29 = vmatpush.msra.mxu0 0.0
    %30 = vmatpush.msra.mxu0 0.0
    %31 = vmatpush.msra.mxu0 0.0
    %32 = vmatpush.msra.mxu0 0.0
    %33 = vmatpush.msra.mxu0 %v16
    %34 = vmatpush.msra.mxu0 %v15
    %35 = vmatpush.msra.mxu0 %v14
    %36 = vmatpush.msra.mxu0 %v13
    %37 = vmatmul.f32.gmra.mxu0 %v19
    %v38 = vpop.f32.mrf.mxu0
    %v39 = vadd.f32 0.0, %v38
    %40 = vdwg.mxu0
    %vm41 = vcmask 130048
    %42 = vst.msk [vmem:[#allocation2] sm:$0xff] %vm41, %v39
    // Predicated region
    $region10: #{tpu_custom_call.1} parent=1 // pred_check
      _
    $region11: #{tpu_custom_call.1} parent=1 // pred_check_branch
      %44 = sbr.rel (0) target = $region13
    $region12: #{tpu_custom_call.1} parent=1 // pred_region
      %46 = vsyncadd [#allocation3], 0
      %s48 = sshll.u32 [#allocation2], 4
      %s49 = int_to_ptr.vmem [resolvable:$true] %s48
      %s50 = sshll.u32 %s2, 4
      %s51 = int_to_ptr.hbm [resolvable:$true] %s50
      %53 = dma.vmem_to_hbm [thread:$0]  %s49, 128, %s51, [#allocation3]
    $region13: #{tpu_custom_call.1} parent=1 // pred_fallthru
      _
    // Predicated region
    $region14: #{tpu_custom_call.1} parent=1 // pred_check
      _
    $region15: #{tpu_custom_call.1} parent=1 // pred_check_branch
      %55 = sbr.rel (0) target = $region17
    $region16: #{tpu_custom_call.1} parent=1 // pred_region
      %57 = dma.done [#allocation3], 128
    $region17: #{tpu_custom_call.1} parent=1 // pred_fallthru
      _
    %58 = vsyncpa [#allocation3], 1

</llo_original>
